<compile_context>
chip_gen: v7x
topology: tpu7x:2x2x1
jax: 0.10.0
libtpu: 0.0.40
codegen_flags: <defaults>
</compile_context>

<pallas_src>
import jax
import jax.numpy as jnp
from jax.experimental import pallas as pl
from jax.experimental.pallas import tpu as pltpu

_LANES = 128
_SUBLANES = 8


def _fp32_silu_kernel(x_ref, o_ref):
    # silu(x) = x * sigmoid(x) = 0.5*x*tanh(0.5*x) + 0.5*x  =  h*tanh(h) + h
    h = 0.5 * x_ref[...].astype(jnp.float32)
    t = jnp.tanh(h)                       # single EUP transcendental / element
    o_ref[...] = (h * t + h).astype(o_ref.dtype)


def _target_block_bytes() -> int:
    """Pick a per-buffer block size appropriate for the TPU generation."""
    try:
        kind = jax.devices()[0].device_kind.lower()
    except Exception:
        return 2 * 1024 * 1024
    if "v7" in kind:
        return 8 * 1024 * 1024   # v7x: fast HBM, amortize per-step overhead
    if "v6" in kind:
        return 4 * 1024 * 1024   # v6e: fits under 32 MiB default scoped VMEM
    return 2 * 1024 * 1024       # v5e / older / unknown: stay conservative


def _round_down_mult(x: int, m: int) -> int:
    return (x // m) * m


def _fp32_silu_2d(x2d: jax.Array, *, block_bytes: int) -> jax.Array:
    rows, cols = x2d.shape
    itemsize = jnp.dtype(x2d.dtype).itemsize

    # Rows per block: ~block_bytes per buffer, multiple of 8 sublanes.
    max_rows = max(1, block_bytes // (cols * itemsize))
    block_rows = max(_SUBLANES, _round_down_mult(max_rows, _SUBLANES))
    if block_rows >= rows:
        block_rows = rows  # single block == full extent (always legal)
    # Keep >= 2 grid steps when possible so "parallel" can shard across both
    # TensorCores on v7x.  (Verify in a profile; switch to CORE_PARALLEL or an
    # explicit leading axis of size 2 if both TCs don't pick up steps.)
    if block_rows == rows and rows > _SUBLANES:
        half = pl.cdiv(rows, 2)
        block_rows = max(_SUBLANES,
                         ((half + _SUBLANES - 1) // _SUBLANES) * _SUBLANES)

    grid = (pl.cdiv(rows, block_rows),)

    n_total = rows * cols
    cost = pl.CostEstimate(
        flops=4 * n_total,
        transcendentals=n_total,
        bytes_accessed=2 * n_total * itemsize,
    )

    # Double-buffered in + out blocks plus headroom for compiler temporaries.
    vmem_limit = 4 * block_rows * cols * itemsize + (16 << 20)

    return pl.pallas_call(
        _fp32_silu_kernel,
        out_shape=jax.ShapeDtypeStruct((rows, cols), x2d.dtype),
        grid_spec=pltpu.PrefetchScalarGridSpec(
            num_scalar_prefetch=0,
            grid=grid,
            in_specs=[pl.BlockSpec((block_rows, cols), lambda i: (i, 0))],
            out_specs=pl.BlockSpec((block_rows, cols), lambda i: (i, 0)),
        ),
        compiler_params=pltpu.CompilerParams(
            dimension_semantics=("parallel",),
            vmem_limit_bytes=int(vmem_limit),
        ),
        cost_estimate=cost,
    )(x2d)


def fp32_silu(x: jax.Array) -> jax.Array:
    if x.size == 0:
        return x

    orig_shape = x.shape
    orig_dtype = x.dtype
    n = x.size
    itemsize = jnp.dtype(orig_dtype).itemsize
    block_bytes = _target_block_bytes()

    last = orig_shape[-1] if x.ndim >= 1 else 1

    # Common activation case: lane-dense last dim, zero-copy 2-D view.
    if x.ndim >= 2 and last % _LANES == 0 and last * itemsize <= block_bytes:
        out2d = _fp32_silu_2d(x.reshape(-1, last), block_bytes=block_bytes)
        return out2d.reshape(orig_shape)

    # Total size is a multiple of 128: still a pure reshape, 128-lane view.
    if n % _LANES == 0:
        out2d = _fp32_silu_2d(x.reshape(-1, _LANES), block_bytes=block_bytes)
        return out2d.reshape(orig_shape)

    # Rare truly-ragged fallback: pad the flat view by < 128 elements.
    pad = (-n) % _LANES
    flat = jnp.pad(x.reshape(-1), (0, pad))
    out2d = _fp32_silu_2d(flat.reshape(-1, _LANES), block_bytes=block_bytes)
    return out2d.reshape(-1)[:n].reshape(orig_shape)


def _ref_fp32_silu(x):
    x32 = x.astype(jnp.float32)
    return (x32 * jax.nn.sigmoid(x32)).astype(x.dtype)


if __name__ == "__main__":
    key = jax.random.PRNGKey(0)
    k1, k2, k3 = jax.random.split(key, 3)

    # Primary check: small 4-D activation, bf16 -> (-1, 128) view path.
    x1 = jax.random.normal(k1, (2, 4, 16, 16), dtype=jnp.float32).astype(jnp.bfloat16)
    o1 = fp32_silu(x1)
    jax.block_until_ready(o1)
    r1 = _ref_fp32_silu(x1)
    assert o1.shape == x1.shape and o1.dtype == x1.dtype
    assert jnp.allclose(o1.astype(jnp.float32), r1.astype(jnp.float32),
                        atol=1e-2, rtol=1e-2)

    # Lane-dense last dim (hidden=256), f32 -> zero-copy 2-D view path.
    x2 = jax.random.normal(k2, (2, 8, 256), dtype=jnp.float32)
    o2 = fp32_silu(x2)
    jax.block_until_ready(o2)
    assert o2.shape == x2.shape and o2.dtype == x2.dtype
    assert jnp.allclose(o2, _ref_fp32_silu(x2), atol=1e-5, rtol=1e-5)

    # Truly ragged shape, f32 -> minimal-pad fallback path.
    x3 = jax.random.normal(k3, (3, 5, 7), dtype=jnp.float32)
    o3 = fp32_silu(x3)
    jax.block_until_ready(o3)
    assert o3.shape == x3.shape and o3.dtype == x3.dtype
    assert jnp.allclose(o3, _ref_fp32_silu(x3), atol=1e-5, rtol=1e-5)

    print("KERNEL_OK")
</pallas_src>

<mosaic_0001>
module attributes {stable_mosaic.version = 11 : i64} {
  func.func @_fp32_silu_kernel(%arg0: i32, %arg1: memref<8x128xbf16, #tpu.memory_space<vmem>>, %arg2: memref<8x128xbf16, #tpu.memory_space<vmem>>) attributes {dimension_semantics = [#tpu.dimension_semantics<parallel>], iteration_bounds = array<i64: 2>, scalar_prefetch = 0 : i64, scratch_operands = 0 : i64, tpu.core_type = #tpu.core_type<tc>, window_params = [{transform_indices = @transform_0, window_bounds = array<i64: 8, 128>}, {transform_indices = @transform_1, window_bounds = array<i64: 8, 128>}]} {
    %c0 = arith.constant 0 : index
    %c0_0 = arith.constant 0 : index
    %0 = vector.load %arg1[%c0, %c0_0] : memref<8x128xbf16, #tpu.memory_space<vmem>>, vector<8x128xbf16>
    %1 = arith.extf %0 : vector<8x128xbf16> to vector<8x128xf32>
    %cst = arith.constant 5.000000e-01 : f32
    %2 = vector.broadcast %cst : f32 to vector<8x128xf32>
    %3 = arith.mulf %2, %1 : vector<8x128xf32>
    %4 = math.tanh %3 : vector<8x128xf32>
    %5 = arith.mulf %3, %4 : vector<8x128xf32>
    %6 = arith.addf %5, %3 : vector<8x128xf32>
    %7 = arith.truncf %6 : vector<8x128xf32> to vector<8x128xbf16>
    %c0_1 = arith.constant 0 : index
    %c0_2 = arith.constant 0 : index
    %8 = vector.load %arg2[%c0_1, %c0_2] : memref<8x128xbf16, #tpu.memory_space<vmem>>, vector<8x128xbf16>
    tpu.vector_store %arg2[%c0_1, %c0_2], %7 {strides = array<i32>} : memref<8x128xbf16, #tpu.memory_space<vmem>>, vector<8x128xbf16>,
    return
  }
  func.func @transform_0(%arg0: i32) -> (i32, i32) {
    %c0_i32 = arith.constant 0 : i32
    %c0_i32_0 = arith.constant 0 : i32
    return %arg0, %c0_i32 : i32, i32
  }
  func.func @transform_1(%arg0: i32) -> (i32, i32) {
    %c0_i32 = arith.constant 0 : i32
    %c0_i32_0 = arith.constant 0 : i32
    return %arg0, %c0_i32 : i32, i32
  }
}

</mosaic_0001>

<llo_original>
// kernel: tpu_custom_call.1
$region0: #{tpu_custom_call.1}
  #allocation0 [shape = 'u32[]', space=smem, size = 0x4, offset = 0x4, fixed_abs, tag = 'smem constant byte address 0x4 - core index']
  #allocation1 [shape = 'u32[144,128]{1,0:T(1,128)}', space=vmem, size = 0x12000, scoped, tag = 'internal scratch']
  %s0 = inlined_call_operand.hbm [shape: bf16[16,128], index: 0, kind: input, shape index: {}]
  %s1 = inlined_call_operand.hbm [shape: bf16[16,128], index: 1, kind: output, shape index: {}]
  %s2 = sld [smem:[#allocation0]]
  $region41: #{tpu_custom_call.1} parent=0
    _
  %s4 = ssub.s32 1, %s2
  %s5 = scalar_select 0, %s4, %s2
  $region1: #{tpu_custom_call.1} parent=0
    #allocation2 [shape = 'u8[4096]{0}', space=vmem, size = 0x1000, scoped, tag = 'input window, operand 0']
    #allocation3 [shape = 's32[2]{0}', space=sflag, size = 0x8, scoped, tag = 'scoped memory for tpu_custom_call.1']
    #allocation4 [shape = 's32[2]{0}', space=sflag, size = 0x8, scoped, tag = 'scoped memory for tpu_custom_call.1']
    #allocation5 [shape = 'u8[4096]{0}', space=vmem, size = 0x1000, scoped, tag = 'output window, operand 0']
    %6 = vsyncpa [#allocation3], 0
    %s7 = scalar_lea.sflag [#allocation3], 1
    %8 = vsyncpa %s7, 0
    %9 = vsyncpa [#allocation4], 0
    %s10 = scalar_lea.sflag [#allocation4], 1
    %11 = vsyncpa %s10, 0
    loop: start=0, step=1, limit=4
    $region2: #{tpu_custom_call.1} parent=1 // loop_pre_header
      _
    $region3: #{tpu_custom_call.1} parent=1 // loop_header
      %s13 = sphi 0, %s17
      %p14 = scmp.ge.s32.totalorder %s13, 4
      %s23 = sphi 0, %s25
      %s26 = sphi 0, %s23
      %s27 = sphi 0, %s26
      %s43 = sphi 0, %s27
      %s49 = sphi 0, %s51
      %s52 = sphi 0, %s49
      %s53 = sphi 0, %s52
      %s69 = sphi 0, %s53
    $region4: #{tpu_custom_call.1} parent=1 // loop_header_branch
      %16 = sbr.rel (%p14) target = $region8
    $region5: #{tpu_custom_call.1} parent=1 // loop_body
      %s18 = ssub.s32 %s13, 1
      %s19 = ssub.s32 %s13, 2
      %s20 = sadd.s32 %s13, 1
      %s21 = ssub.s32 %s13, %s20
      %p22 = scmp.eq.s32.totalorder %s21, 0
      %s24 = sadd.s32 %s23, 1
      %s25 = scalar_select %p22, %s23, %s24
      %p28 = pneg %p22
      %p29 = scmp.eq.s32.totalorder %s13, 1
      %p30 = por %p28, %p29
      %p31 = scmp.ne.s32.totalorder %s23, %s26
      %p32 = scmp.eq.s32.totalorder %s13, 0
      %p33 = por %p31, %p32
      %p34 = scmp.ne.s32.totalorder %s23, %s26
      %p35 = scmp.eq.s32.totalorder %s18, 1
      %p36 = por %p34, %p35
      %p37 = scmp.ne.s32.totalorder %s26, %s27
      %p38 = scmp.eq.s32.totalorder %s18, 0
      %p39 = por %p37, %p38
      %p40 = scmp.ne.s32.totalorder %s26, %s27
      %p41 = scmp.eq.s32.totalorder %s19, 1
      %p42 = por %p40, %p41
      %p44 = scmp.ne.s32.totalorder %s27, %s43
      %p45 = scmp.eq.s32.totalorder %s19, 0
      %p46 = por %p44, %p45
      %s47 = ssub.s32 %s13, %s20
      %p48 = scmp.eq.s32.totalorder %s47, 0
      %s50 = sadd.s32 %s49, 1
      %s51 = scalar_select %p48, %s49, %s50
      %p54 = pneg %p48
      %p55 = scmp.eq.s32.totalorder %s13, 1
      %p56 = por %p54, %p55
      %p57 = scmp.ne.s32.totalorder %s49, %s52
      %p58 = scmp.eq.s32.totalorder %s13, 0
      %p59 = por %p57, %p58
      %p60 = scmp.ne.s32.totalorder %s49, %s52
      %p61 = scmp.eq.s32.totalorder %s18, 1
      %p62 = por %p60, %p61
      %p63 = scmp.ne.s32.totalorder %s52, %s53
      %p64 = scmp.eq.s32.totalorder %s18, 0
      %p65 = por %p63, %p64
      %p66 = scmp.ne.s32.totalorder %s52, %s53
      %p67 = scmp.eq.s32.totalorder %s19, 1
      %p68 = por %p66, %p67
      %p70 = scmp.ne.s32.totalorder %s53, %s69
      %p71 = scmp.eq.s32.totalorder %s19, 0
      %p72 = por %p70, %p71
      %p73 = scmp.le.s32.totalorder 1, %s13
      %p74 = scmp.lt.s32.totalorder %s13, 3
      %p75 = pnand %p73, %p74
      %p76 = pneg %p75
      // Predicated region
      $region9: #{tpu_custom_call.1} parent=5 // pred_check
        _
      $region10: #{tpu_custom_call.1} parent=5 // pred_check_branch
        %78 = sbr.rel (%p75) target = $region12
      $region11: #{tpu_custom_call.1} parent=5 // pred_region
        %s79 = ssub.s32 %s13, 1
      $region12: #{tpu_custom_call.1} parent=5 // pred_fallthru
        _
      %p80 = scmp.lt.s32.totalorder %s13, 2
      // Predicated region
      $region13: #{tpu_custom_call.1} parent=5 // pred_check
        %p81 = pneg %p80
      $region14: #{tpu_custom_call.1} parent=5 // pred_check_branch
        %83 = sbr.rel (%p81) target = $region16
      $region15: #{tpu_custom_call.1} parent=5 // pred_region
        // Predicated region
        $region17: #{tpu_custom_call.1} parent=15 // pred_check
          %p84 = pneg %p33
        $region18: #{tpu_custom_call.1} parent=15 // pred_check_branch
          %86 = sbr.rel (%p84) target = $region20
        $region19: #{tpu_custom_call.1} parent=15 // pred_region
          %s87 = sand.u32 %s23, 1
          %s88 = scalar_lea.sflag [#allocation3], %s87
          %s89 = sand.u32 %s23, 1
          %s90 = smul.addr %s89, 4
          %s91 = scalar_lea.vmem [#allocation2], %s90
          %s93 = ssub.s32 64, 64
          %94 = vsyncadd %s88, %s93
          %s95 = smul.addr %s13, 64
          %s96 = scalar_lea.hbm %s0, %s95
          %s98 = sshll.u32 %s91, 4
          %s99 = int_to_ptr.vmem [resolvable:$true] %s98
          %101 = dma.hbm_to_vmem [thread:$0]  %s96, 64, %s99, %s88
        $region20: #{tpu_custom_call.1} parent=15 // pred_fallthru
          _
      $region16: #{tpu_custom_call.1} parent=5 // pred_fallthru
        _
      %p102 = scmp.le.s32.totalorder 1, %s13
      %p103 = scmp.lt.s32.totalorder %s13, 3
      %p104 = pnand %p102, %p103
      %p105 = pneg %p104
      // Predicated region
      $region21: #{tpu_custom_call.1} parent=5 // pred_check
        _
      $region22: #{tpu_custom_call.1} parent=5 // pred_check_branch
        %107 = sbr.rel (%p104) target = $region24
      $region23: #{tpu_custom_call.1} parent=5 // pred_region
        %s108 = ssub.s32 %s13, 1
        %s109 = sand.u32 %s26, 1
        %s110 = scalar_lea.sflag [#allocation3], %s109
        %s111 = sand.u32 %s26, 1
        %s112 = smul.addr %s111, 4
        %s113 = scalar_lea.vmem [#allocation2], %s112
        // Predicated region
        $region25: #{tpu_custom_call.1} parent=23 // pred_check
          %p114 = pneg %p39
        $region26: #{tpu_custom_call.1} parent=23 // pred_check_branch
          %116 = sbr.rel (%p114) target = $region28
        $region27: #{tpu_custom_call.1} parent=23 // pred_region
          %117 = dma.done %s110, 64
        $region28: #{tpu_custom_call.1} parent=23 // pred_fallthru
          _
        %s118 = sand.u32 %s26, 1
        %s119 = scalar_lea.sflag [#allocation3], %s118
        %s120 = sand.u32 %s26, 1
        %s121 = smul.addr %s120, 4
        %s122 = scalar_lea.vmem [#allocation2], %s121
        %p123 = pneg %p39
        %p124 = pneg %p36
        %p125 = pneg %p65
        %p126 = pneg %p62
        %s127 = sand.u32 %s52, 1
        %s128 = scalar_lea.sflag [#allocation4], %s127
        %s129 = sand.u32 %s52, 1
        %s130 = smul.addr %s129, 4
        %s131 = scalar_lea.vmem [#allocation5], %s130
        %v132 = vld [vmem:[%s113] sm:$0xf]
        %v133 = vunpack.c.l.bf16 %v132
        %v134 = vmul.f32 %v133, 0.5
        %v135 = vtanh.pop %v134
        %v136 = vmul.f32 %v134, %v135
        %v137 = vadd.f32 %v136, %v134
        %v138 = vpack.c.bf16 %v137, %v137
        %139 = vst [vmem:[%s131] sm:$0xf] %v138
        %s140 = sand.u32 %s52, 1
        %s141 = scalar_lea.sflag [#allocation4], %s140
        %s142 = sand.u32 %s52, 1
        %s143 = smul.addr %s142, 4
        %s144 = scalar_lea.vmem [#allocation5], %s143
        // Predicated region
        $region29: #{tpu_custom_call.1} parent=23 // pred_check
          %p145 = pneg %p62
        $region30: #{tpu_custom_call.1} parent=23 // pred_check_branch
          %147 = sbr.rel (%p145) target = $region32
        $region31: #{tpu_custom_call.1} parent=23 // pred_region
          %s149 = ssub.s32 64, 64
          %150 = vsyncadd %s141, %s149
          %s151 = smul.addr %s18, 64
          %s152 = scalar_lea.hbm %s1, %s151
          %s154 = sshll.u32 %s144, 4
          %s155 = int_to_ptr.vmem [resolvable:$true] %s154
          %157 = dma.vmem_to_hbm [thread:$0]  %s155, 64, %s152, %s141
        $region32: #{tpu_custom_call.1} parent=23 // pred_fallthru
          _
      $region24: #{tpu_custom_call.1} parent=5 // pred_fallthru
        _
      %p158 = scmp.le.s32.totalorder 2, %s13
      // Predicated region
      $region33: #{tpu_custom_call.1} parent=5 // pred_check
        %p159 = pneg %p158
      $region34: #{tpu_custom_call.1} parent=5 // pred_check_branch
        %161 = sbr.rel (%p159) target = $region36
      $region35: #{tpu_custom_call.1} parent=5 // pred_region
        %s162 = ssub.s32 %s13, 2
        // Predicated region
        $region37: #{tpu_custom_call.1} parent=35 // pred_check
          %p163 = pneg %p68
        $region38: #{tpu_custom_call.1} parent=35 // pred_check_branch
          %165 = sbr.rel (%p163) target = $region40
        $region39: #{tpu_custom_call.1} parent=35 // pred_region
          %s166 = sand.u32 %s53, 1
          %s167 = scalar_lea.sflag [#allocation4], %s166
          %s168 = sand.u32 %s53, 1
          %s169 = smul.addr %s168, 4
          %s170 = scalar_lea.vmem [#allocation5], %s169
          %171 = dma.done %s167, 64
        $region40: #{tpu_custom_call.1} parent=35 // pred_fallthru
          _
      $region36: #{tpu_custom_call.1} parent=5 // pred_fallthru
        _
    $region6: #{tpu_custom_call.1} parent=1 // loop_footer
      %s17 = sadd.s32 1, %s13
    $region7: #{tpu_custom_call.1} parent=1 // loop_footer_branch
      %12 = sbr.rel target = $region3
    $region8: #{tpu_custom_call.1} parent=1 // loop_exit
      _
    %172 = vsyncpa [#allocation3], 1
    %s173 = scalar_lea.sflag [#allocation3], 1
    %174 = vsyncpa %s173, 1
    %175 = vsyncpa [#allocation4], 1
    %s176 = scalar_lea.sflag [#allocation4], 1
    %177 = vsyncpa %s176, 1

</llo_original>
